<compile_context>
chip_gen: v7x
topology: tpu7x:2x2x1
jax: 0.10.0
libtpu: 0.0.40
codegen_flags: <defaults>
</compile_context>

<pallas_src>
import functools

import jax
import jax.numpy as jnp
from jax import lax
from jax.experimental import pallas as pl
from jax.experimental.pallas import tpu as pltpu

_EPS = 1e-5

# Blocks are sized by the f32 working set (inputs are upcast to f32 for stats),
# not the input itemsize, so bf16 inputs do not blow the budget.
_TARGET_BLOCK_F32_BYTES = 4 * 1024 * 1024   # ~4 MiB per block
_MAX_BLOCK_F32_BYTES = 6 * 1024 * 1024      # hard cap before two-pass fallback
_VMEM_LIMIT_BYTES = 48 * 1024 * 1024        # explicit scoped VMEM (< v7x 64 MiB physical)


def _compiler_params(sem):
    return pltpu.CompilerParams(dimension_semantics=sem,
                                vmem_limit_bytes=_VMEM_LIMIT_BYTES)


def _pick_block(total, inner_elems, target_bytes=_TARGET_BLOCK_F32_BYTES):
    """Block extent along a second-to-last dim: either the full extent (always a
    legal tile) or a multiple of 8 whose f32 working set is roughly <= target.
    Ragged last blocks are handled via pl.cdiv grids + Pallas masking."""
    blk = max(8, int(target_bytes // (inner_elems * 4)) // 8 * 8)
    return total if blk >= total else blk


# ----------------------------------------------------------------------------
# Fused single-pass kernels (stats + normalize in one HBM read / one HBM write)
# ----------------------------------------------------------------------------

def _inorm_kernel(x_ref, o_ref, *, eps, inv_count):
    # x_ref: (rows_blk, HW) -- each row is one (n, c) plane normalized over HW.
    x = x_ref[...].astype(jnp.float32)
    s = jnp.sum(x, axis=-1, keepdims=True)
    ss = jnp.sum(x * x, axis=-1, keepdims=True)
    mean = s * inv_count
    var = jnp.maximum(ss * inv_count - mean * mean, 0.0)
    o_ref[...] = ((x - mean) * lax.rsqrt(var + eps)).astype(o_ref.dtype)


def _bnorm_fused_kernel(x_ref, w_ref, b_ref, o_ref, *, eps, inv_count):
    # x_ref: (N, c_blk, HW) -- each channel normalized over (N, HW).
    x = x_ref[...].astype(jnp.float32)
    s = jnp.sum(jnp.sum(x, axis=2, keepdims=True), axis=0, keepdims=True)       # (1,c_blk,1)
    ss = jnp.sum(jnp.sum(x * x, axis=2, keepdims=True), axis=0, keepdims=True)  # (1,c_blk,1)
    mean = s * inv_count
    var = jnp.maximum(ss * inv_count - mean * mean, 0.0)
    w = w_ref[...].astype(jnp.float32)[None]    # (1, c_blk, 1)
    b = b_ref[...].astype(jnp.float32)[None]    # (1, c_blk, 1)
    scale = lax.rsqrt(var + eps) * w
    shift = b - mean * scale
    o_ref[...] = (x * scale + shift).astype(o_ref.dtype)


# ----------------------------------------------------------------------------
# Two-pass fallback (per-channel stats accumulation, then normalize)
# ----------------------------------------------------------------------------

def _bnorm_stats_kernel(x_ref, s_ref, ss_ref, *, hw_total):
    n = pl.program_id(1)
    h = pl.program_id(2)
    x = x_ref[...].astype(jnp.float32)[0]          # (c_blk, hw_blk)
    hw_blk = x.shape[-1]
    if hw_total % hw_blk != 0:
        # Mask out-of-range spatial columns of the ragged last HW block so the
        # padded garbage cannot contaminate the per-channel sums.
        col = lax.broadcasted_iota(jnp.int32, x.shape, 1) + h * hw_blk
        x = jnp.where(col < hw_total, x, 0.0)
    ps = jnp.sum(x, axis=1, keepdims=True)         # (c_blk, 1)
    pss = jnp.sum(x * x, axis=1, keepdims=True)    # (c_blk, 1)

    @pl.when(jnp.logical_and(n == 0, h == 0))
    def _():
        s_ref[...] = ps
        ss_ref[...] = pss

    @pl.when(jnp.logical_or(n > 0, h > 0))
    def _():
        s_ref[...] += ps
        ss_ref[...] += pss


def _bnorm_apply_kernel(x_ref, s_ref, ss_ref, w_ref, b_ref, o_ref, *, eps, inv_count):
    x = x_ref[...].astype(jnp.float32)             # (1, c_blk, hw_blk)
    mean = s_ref[...] * inv_count                  # (c_blk, 1)
    var = jnp.maximum(ss_ref[...] * inv_count - mean * mean, 0.0)
    w = w_ref[...].astype(jnp.float32)
    b = b_ref[...].astype(jnp.float32)
    scale = lax.rsqrt(var + eps) * w               # (c_blk, 1)
    shift = b - mean * scale
    o_ref[...] = (x * scale[None] + shift[None]).astype(o_ref.dtype)


def _bnorm_two_pass(x3, w2, b2, eps):
    """Two-pass batch norm over (N, C, HW): pass 1 accumulates per-channel
    sum / sum-sq; pass 2 normalizes. Always fits VMEM (bounded blocks)."""
    N, C, HW = x3.shape
    # Spatial tile: multiple of 128 (or full HW), small enough that an 8-channel
    # block still respects the target working set.
    hw_limit = _TARGET_BLOCK_F32_BYTES // (8 * 4)
    hw_blk = HW if HW <= hw_limit else max(128, (hw_limit // 128) * 128)
    c_blk = _pick_block(C, hw_blk)
    grid = (pl.cdiv(C, c_blk), N, pl.cdiv(HW, hw_blk))
    inv_count = 1.0 / float(N * HW)

    sums, sqsums = pl.pallas_call(
        functools.partial(_bnorm_stats_kernel, hw_total=HW),
        out_shape=(jax.ShapeDtypeStruct((C, 1), jnp.float32),
                   jax.ShapeDtypeStruct((C, 1), jnp.float32)),
        grid_spec=pl.GridSpec(
            grid=grid,
            in_specs=[pl.BlockSpec((1, c_blk, hw_blk), lambda c, n, h: (n, c, h))],
            out_specs=[pl.BlockSpec((c_blk, 1), lambda c, n, h: (c, 0)),
                       pl.BlockSpec((c_blk, 1), lambda c, n, h: (c, 0))],
        ),
        compiler_params=_compiler_params(("parallel", "arbitrary", "arbitrary")),
    )(x3)

    out = pl.pallas_call(
        functools.partial(_bnorm_apply_kernel, eps=float(eps), inv_count=inv_count),
        out_shape=jax.ShapeDtypeStruct((N, C, HW), x3.dtype),
        grid_spec=pl.GridSpec(
            grid=grid,
            in_specs=[pl.BlockSpec((1, c_blk, hw_blk), lambda c, n, h: (n, c, h)),
                      pl.BlockSpec((c_blk, 1), lambda c, n, h: (c, 0)),
                      pl.BlockSpec((c_blk, 1), lambda c, n, h: (c, 0)),
                      pl.BlockSpec((c_blk, 1), lambda c, n, h: (c, 0)),
                      pl.BlockSpec((c_blk, 1), lambda c, n, h: (c, 0))],
            out_specs=pl.BlockSpec((1, c_blk, hw_blk), lambda c, n, h: (n, c, h)),
        ),
        compiler_params=_compiler_params(("parallel", "parallel", "parallel")),
    )(x3, sums, sqsums, w2, b2)
    return out


# ----------------------------------------------------------------------------
# Public wrapper
# ----------------------------------------------------------------------------

def norm2d_pallas(x, norm_mode, weight=None, bias=None, eps=_EPS, *, force_two_pass=False):
    """Forward pass of Norm2d for NCHW input `x`."""
    N, C, H, W = x.shape
    HW = H * W

    if norm_mode == "inorm":
        # nn.InstanceNorm2d defaults: affine=False, track_running_stats=False.
        R = N * C
        rows_blk = _pick_block(R, HW)
        if force_two_pass or rows_blk * HW * 4 > _MAX_BLOCK_F32_BYTES:
            # Plane too large for one fused block: instance norm == batch norm
            # with batch 1 on the (1, N*C, HW) view and identity affine.
            x3 = x.reshape(1, R, HW)
            w2 = jnp.ones((R, 1), jnp.float32)
            b2 = jnp.zeros((R, 1), jnp.float32)
            return _bnorm_two_pass(x3, w2, b2, eps).reshape(N, C, H, W)
        x2 = x.reshape(R, HW)                       # free metadata reshape (contiguous)
        out = pl.pallas_call(
            functools.partial(_inorm_kernel, eps=float(eps), inv_count=1.0 / float(HW)),
            out_shape=jax.ShapeDtypeStruct((R, HW), x.dtype),
            grid_spec=pl.GridSpec(
                grid=(pl.cdiv(R, rows_blk),),
                in_specs=[pl.BlockSpec((rows_blk, HW), lambda i: (i, 0))],
                out_specs=pl.BlockSpec((rows_blk, HW), lambda i: (i, 0)),
            ),
            compiler_params=_compiler_params(("parallel",)),
        )(x2)
        return out.reshape(N, C, H, W)

    elif norm_mode == "bnorm":
        # nn.BatchNorm2d training-mode forward with default affine params.
        # TODO(synk): running_mean/running_var momentum updates are training-state
        # bookkeeping, not part of the returned tensor; not produced here.
        if weight is None:
            weight = jnp.ones((C,), jnp.float32)
        if bias is None:
            bias = jnp.zeros((C,), jnp.float32)
        w2 = jnp.asarray(weight).reshape(C, 1)
        b2 = jnp.asarray(bias).reshape(C, 1)
        x3 = x.reshape(N, C, HW)                    # free metadata reshape (contiguous)
        c_blk = _pick_block(C, N * HW)
        if force_two_pass or c_blk * N * HW * 4 > _MAX_BLOCK_F32_BYTES:
            return _bnorm_two_pass(x3, w2, b2, eps).reshape(N, C, H, W)
        out = pl.pallas_call(
            functools.partial(_bnorm_fused_kernel, eps=float(eps),
                              inv_count=1.0 / float(N * HW)),
            out_shape=jax.ShapeDtypeStruct((N, C, HW), x.dtype),
            grid_spec=pl.GridSpec(
                grid=(pl.cdiv(C, c_blk),),
                in_specs=[
                    pl.BlockSpec((N, c_blk, HW), lambda j: (0, j, 0)),
                    pl.BlockSpec((c_blk, 1), lambda j: (j, 0)),
                    pl.BlockSpec((c_blk, 1), lambda j: (j, 0)),
                ],
                out_specs=pl.BlockSpec((N, c_blk, HW), lambda j: (0, j, 0)),
            ),
            compiler_params=_compiler_params(("parallel",)),
        )(x3, w2, b2)
        return out.reshape(N, C, H, W)

    else:
        raise ValueError(f"unknown norm_mode: {norm_mode!r}")


if __name__ == "__main__":
    key = jax.random.PRNGKey(0)
    # NCHW input: batch=2, channels=4, spatial=16x16
    x = jax.random.normal(key, (2, 4, 16, 16), dtype=jnp.float32)

    def ref_inorm(x):
        m = x.mean(axis=(2, 3), keepdims=True)
        v = x.var(axis=(2, 3), keepdims=True)       # biased variance (PyTorch forward)
        return (x - m) / jnp.sqrt(v + _EPS)

    def ref_bnorm(x, w=None, b=None):
        m = x.mean(axis=(0, 2, 3), keepdims=True)
        v = x.var(axis=(0, 2, 3), keepdims=True)
        y = (x - m) / jnp.sqrt(v + _EPS)
        if w is not None:
            y = y * w.reshape(1, -1, 1, 1) + b.reshape(1, -1, 1, 1)
        return y

    # --- Instance norm (norm_mode='inorm') ---
    y_in = jax.block_until_ready(norm2d_pallas(x, "inorm"))
    assert jnp.allclose(y_in, ref_inorm(x), atol=1e-5, rtol=1e-5), "inorm mismatch"

    # --- Batch norm (norm_mode='bnorm'), default affine (weight=1, bias=0) ---
    y_bn = jax.block_until_ready(norm2d_pallas(x, "bnorm"))
    assert jnp.allclose(y_bn, ref_bnorm(x), atol=1e-5, rtol=1e-5), "bnorm mismatch"

    # --- Batch norm with non-trivial affine params ---
    kw, kb = jax.random.split(jax.random.PRNGKey(1))
    w = jax.random.normal(kw, (4,), dtype=jnp.float32)
    b = jax.random.normal(kb, (4,), dtype=jnp.float32)
    y_bn2 = jax.block_until_ready(norm2d_pallas(x, "bnorm", weight=w, bias=b))
    assert jnp.allclose(y_bn2, ref_bnorm(x, w, b), atol=1e-5, rtol=1e-5), "bnorm affine mismatch"

    # --- Exercise the two-pass (VMEM-bounded) fallback path for both modes ---
    y_bn3 = jax.block_until_ready(
        norm2d_pallas(x, "bnorm", weight=w, bias=b, force_two_pass=True))
    assert jnp.allclose(y_bn3, ref_bnorm(x, w, b), atol=1e-5, rtol=1e-5), "two-pass bnorm mismatch"

    y_in2 = jax.block_until_ready(norm2d_pallas(x, "inorm", force_two_pass=True))
    assert jnp.allclose(y_in2, ref_inorm(x), atol=1e-5, rtol=1e-5), "two-pass inorm mismatch"

    print("KERNEL_OK")
</pallas_src>

<mosaic_0001>
module attributes {stable_mosaic.version = 11 : i64} {
  func.func @_inorm_kernel(%arg0: i32, %arg1: memref<8x256xf32, #tpu.memory_space<vmem>>, %arg2: memref<8x256xf32, #tpu.memory_space<vmem>>) attributes {dimension_semantics = [#tpu.dimension_semantics<parallel>], iteration_bounds = array<i64: 1>, scalar_prefetch = 0 : i64, scratch_operands = 0 : i64, tpu.core_type = #tpu.core_type<tc>, window_params = [{transform_indices = @transform_0, window_bounds = array<i64: 8, 256>}, {transform_indices = @transform_1, window_bounds = array<i64: 8, 256>}]} {
    %c0 = arith.constant 0 : index
    %c0_0 = arith.constant 0 : index
    %0 = vector.load %arg1[%c0, %c0_0] : memref<8x256xf32, #tpu.memory_space<vmem>>, vector<8x256xf32>
    %cst = arith.constant dense<0.000000e+00> : vector<8xf32>
    %1 = vector.multi_reduction <add>, %0, %cst [1] : vector<8x256xf32> to vector<8xf32>
    %2 = vector.shape_cast %1 : vector<8xf32> to vector<8x1xf32>
    %3 = arith.mulf %0, %0 : vector<8x256xf32>
    %cst_1 = arith.constant dense<0.000000e+00> : vector<8xf32>
    %4 = vector.multi_reduction <add>, %3, %cst_1 [1] : vector<8x256xf32> to vector<8xf32>
    %5 = vector.shape_cast %4 : vector<8xf32> to vector<8x1xf32>
    %cst_2 = arith.constant 3.906250e-03 : f32
    %6 = vector.broadcast %cst_2 : f32 to vector<8x1xf32>
    %7 = arith.mulf %2, %6 : vector<8x1xf32>
    %cst_3 = arith.constant 3.906250e-03 : f32
    %8 = vector.broadcast %cst_3 : f32 to vector<8x1xf32>
    %9 = arith.mulf %5, %8 : vector<8x1xf32>
    %10 = arith.mulf %7, %7 : vector<8x1xf32>
    %11 = arith.subf %9, %10 : vector<8x1xf32>
    %cst_4 = arith.constant 0.000000e+00 : f32
    %12 = vector.broadcast %cst_4 : f32 to vector<8x1xf32>
    %13 = arith.maximumf %11, %12 : vector<8x1xf32>
    %14 = vector.broadcast %7 : vector<8x1xf32> to vector<8x256xf32>
    %15 = arith.subf %0, %14 : vector<8x256xf32>
    %cst_5 = arith.constant 9.99999974E-6 : f32
    %16 = vector.broadcast %cst_5 : f32 to vector<8x1xf32>
    %17 = arith.addf %13, %16 : vector<8x1xf32>
    %18 = math.rsqrt %17 : vector<8x1xf32>
    %19 = vector.broadcast %18 : vector<8x1xf32> to vector<8x256xf32>
    %20 = arith.mulf %15, %19 : vector<8x256xf32>
    %c0_6 = arith.constant 0 : index
    %c0_7 = arith.constant 0 : index
    %21 = vector.load %arg2[%c0_6, %c0_7] : memref<8x256xf32, #tpu.memory_space<vmem>>, vector<8x256xf32>
    tpu.vector_store %arg2[%c0_6, %c0_7], %20 {strides = array<i32>} : memref<8x256xf32, #tpu.memory_space<vmem>>, vector<8x256xf32>,
    return
  }
  func.func @transform_0(%arg0: i32) -> (i32, i32) {
    %c0_i32 = arith.constant 0 : i32
    %c0_i32_0 = arith.constant 0 : i32
    return %arg0, %c0_i32 : i32, i32
  }
  func.func @transform_1(%arg0: i32) -> (i32, i32) {
    %c0_i32 = arith.constant 0 : i32
    %c0_i32_0 = arith.constant 0 : i32
    return %arg0, %c0_i32 : i32, i32
  }
}

</mosaic_0001>

<llo_original>
// kernel: tpu_custom_call.1
$region0: #{tpu_custom_call.1}
  #allocation0 [shape = 'u32[]', space=smem, size = 0x4, offset = 0x4, fixed_abs, tag = 'smem constant byte address 0x4 - core index']
  #allocation1 [shape = 'u32[144,128]{1,0:T(1,128)}', space=vmem, size = 0x12000, scoped, tag = 'internal scratch']
  %s0 = inlined_call_operand.hbm [shape: f32[8,256], index: 0, kind: input, shape index: {}]
  %s1 = inlined_call_operand.hbm [shape: f32[8,256], index: 1, kind: output, shape index: {}]
  %s2 = sld [smem:[#allocation0]]
  $region18: #{tpu_custom_call.1} parent=0
    _
  %s4 = ssub.s32 1, %s2
  %s5 = scalar_select 0, %s4, %s2
  $region1: #{tpu_custom_call.1} parent=0
    #allocation2 [shape = 'u8[8192]{0}', space=vmem, size = 0x2000, scoped, tag = 'input window, operand 0, single buffered']
    #allocation3 [shape = 's32[1]{0}', space=sflag, size = 0x4, scoped, tag = 'scoped memory for tpu_custom_call.1']
    #allocation4 [shape = 's32[1]{0}', space=sflag, size = 0x4, scoped, tag = 'scoped memory for tpu_custom_call.1']
    #allocation5 [shape = 'u8[8192]{0}', space=vmem, size = 0x2000, scoped, tag = 'output window, operand 0, single buffered']
    %6 = vsyncpa [#allocation3], 0
    %7 = vsyncpa [#allocation4], 0
    // Predicated region
    $region2: #{tpu_custom_call.1} parent=1 // pred_check
      _
    $region3: #{tpu_custom_call.1} parent=1 // pred_check_branch
      %9 = sbr.rel (0) target = $region5
    $region4: #{tpu_custom_call.1} parent=1 // pred_region
      %s11 = ssub.s32 256, 256
      %12 = vsyncadd [#allocation3], %s11
      %s14 = sshll.u32 [#allocation2], 4
      %s15 = int_to_ptr.vmem [resolvable:$true] %s14
      %17 = dma.hbm_to_vmem [thread:$0]  %s0, 256, %s15, [#allocation3]
    $region5: #{tpu_custom_call.1} parent=1 // pred_fallthru
      _
    // Predicated region
    $region6: #{tpu_custom_call.1} parent=1 // pred_check
      _
    $region7: #{tpu_custom_call.1} parent=1 // pred_check_branch
      %19 = sbr.rel (0) target = $region9
    $region8: #{tpu_custom_call.1} parent=1 // pred_region
      %20 = dma.done [#allocation3], 256
    $region9: #{tpu_custom_call.1} parent=1 // pred_fallthru
      _
    %v21 = vld [vmem:[#allocation2] sm:$0xff]
    %v22 = vld [vmem:[#allocation2 + $0x8] sm:$0xff]
    %v23 = vadd.f32 %v21, %v22
    %24 = vadd.xlane.f32.xlu0 %v23
    %v25 = vpop.xlane.xlu0 %24
    %v26 = vmul.f32 %v21, %v21
    %v27 = vmul.f32 %v22, %v22
    %v28 = vadd.f32 %v26, %v27
    %29 = vadd.xlane.f32.xlu0 %v28
    %v30 = vpop.xlane.xlu0 %29
    %v31 = vmul.f32 %v25, 0.00390625
    %v32 = vmul.f32 %v30, 0.00390625
    %v33 = vmul.f32 %v31, %v31
    %v34 = vsub.f32 %v32, %v33
    %v35 = vmax.f32 %v34, 0.0
    %v36 = vsub.f32 %v21, %v31
    %v37 = vsub.f32 %v22, %v31
    %v38 = vadd.f32 %v35, 1e-05
    %v39 = vrsqrt.pop %v38
    %v40 = vmul.f32 %v36, %v39
    %v41 = vmul.f32 %v37, %v39
    %42 = vst [vmem:[#allocation5] sm:$0xff] %v40
    %43 = vst [vmem:[#allocation5 + $0x8] sm:$0xff] %v41
    // Predicated region
    $region10: #{tpu_custom_call.1} parent=1 // pred_check
      _
    $region11: #{tpu_custom_call.1} parent=1 // pred_check_branch
      %45 = sbr.rel (0) target = $region13
    $region12: #{tpu_custom_call.1} parent=1 // pred_region
      %s47 = ssub.s32 256, 256
      %48 = vsyncadd [#allocation4], %s47
      %s50 = sshll.u32 [#allocation5], 4
      %s51 = int_to_ptr.vmem [resolvable:$true] %s50
      %53 = dma.vmem_to_hbm [thread:$0]  %s51, 256, %s1, [#allocation4]
    $region13: #{tpu_custom_call.1} parent=1 // pred_fallthru
      _
    // Predicated region
    $region14: #{tpu_custom_call.1} parent=1 // pred_check
      _
    $region15: #{tpu_custom_call.1} parent=1 // pred_check_branch
      %55 = sbr.rel (0) target = $region17
    $region16: #{tpu_custom_call.1} parent=1 // pred_region
      %56 = dma.done [#allocation4], 256
    $region17: #{tpu_custom_call.1} parent=1 // pred_fallthru
      _
    %57 = vsyncpa [#allocation3], 1
    %58 = vsyncpa [#allocation4], 1

</llo_original>
